<compile_context>
chip_gen: v7x
topology: tpu7x:2x2x1
jax: 0.10.0
libtpu: 0.0.40
codegen_flags: <defaults>
</compile_context>

<pallas_src>
import jax
import jax.numpy as jnp
from jax.experimental import pallas as pl
from jax.experimental.pallas import tpu as pltpu

# ---------------- model sizes (small, consistent with the module) ----------------
EMBED_DIM = 64            # embed_dim of PredictorLG
C = EMBED_DIM // 2        # hidden width after in_conv (= 32)
NUM_HEADS = 2
HEAD_DIM = C // NUM_HEADS # 16
B = 2                     # bs * n_length
N = 8                     # num_tokens
BN = B * N
LN_EPS = 1e-5

# ---------------- packed parameter slab layout (f32, 128 lanes wide) ----------------
# every block starts at a multiple-of-8 row and lane offset 0 -> clean static ref views
SLAB_W  = 128
R_MISC  = 0                      # row 0: ln_w | row 1: ln_b | row 2: w4 row | rows 3/4: head masks
R_WIN   = 8                      # w_in   (D, C)
R_QKV   = R_WIN + EMBED_DIM      # w_qkv  (C, 3C)   [wq*scale | wk | wv]
R_OG    = R_QKV + C              # w_og   (C, 2C)   [wo@w3[:C] | wo@w3[C:]]
R_BIAS  = R_OG + C               # bias2  (2*BN, BN) block-diag batch bias, stacked for 2 heads
R_MAVG  = R_BIAS + 2 * BN        # m_avg  (BN, BN)  per-batch token-mean operator
SLAB_ROWS = R_MAVG + BN          # = 184


def _gelu_exact(x):
    # PyTorch nn.GELU() default: exact erf formulation.
    return 0.5 * x * (1.0 + jax.lax.erf(x * (1.0 / jnp.sqrt(2.0).astype(x.dtype))))


# ---------------- Pallas kernel: full PredictorLG forward, whole batch at once ----------------
def predictor_lg_kernel(x_ref, slab_ref, o_ref):
    f32 = jnp.float32
    x = x_ref[...]                                               # (BN, D)

    # --- static views into the packed parameter slab (zero-cost) ---
    ln_w  = slab_ref[0:1, 0:EMBED_DIM]                           # (1, D)
    ln_b  = slab_ref[1:2, 0:EMBED_DIM]                           # (1, D)
    w4r   = slab_ref[2:3, 0:C]                                   # (1, C)
    m0    = slab_ref[3:4, 0:C]                                   # (1, C) head-0 lane mask
    m1    = slab_ref[4:5, 0:C]                                   # (1, C) head-1 lane mask
    w_in  = slab_ref[R_WIN:R_WIN + EMBED_DIM, 0:C]               # (D, C)
    w_qkv = slab_ref[R_QKV:R_QKV + C, 0:3 * C]                   # (C, 3C)
    w_og  = slab_ref[R_OG:R_OG + C, 0:2 * C]                     # (C, 2C)
    bias2 = slab_ref[R_BIAS:R_BIAS + 2 * BN, 0:BN]               # (2BN, BN)
    m_avg = slab_ref[R_MAVG:R_MAVG + BN, 0:BN]                   # (BN, BN)

    # --- in_conv: LayerNorm(D) -> Linear(D, C, no bias) -> GELU ---
    mu = jnp.mean(x, axis=-1, keepdims=True)
    xc = x - mu
    var = jnp.mean(xc * xc, axis=-1, keepdims=True)
    xn = xc * jax.lax.rsqrt(var + LN_EPS) * ln_w + ln_b

    h = _gelu_exact(jnp.dot(xn, w_in, preferred_element_type=f32))       # (BN, C)

    # --- fused QKV projection (1/sqrt(head_dim) is folded into wq host-side) ---
    qkv = jnp.dot(h, w_qkv, preferred_element_type=f32)                  # (BN, 3C)
    q = qkv[:, 0:C]
    k = qkv[:, C:2 * C]
    v = qkv[:, 2 * C:3 * C]

    # --- both heads in ONE score matmul + ONE softmax pass ---
    # head-masked Q stacked on sublanes; contraction over masked lanes contributes 0
    qs = jnp.concatenate([q * m0, q * m1], axis=0)                       # (2BN, C)
    s = jax.lax.dot_general(qs, k, (((1,), (1,)), ((), ())),
                            preferred_element_type=f32) + bias2          # (2BN, BN), no k.T
    s = s - jnp.max(s, axis=-1, keepdims=True)
    p = jnp.exp(s)
    p = p / jnp.sum(p, axis=-1, keepdims=True)                           # exact divide (robust)

    # head outputs land in disjoint lanes (masked V) -> summing heads == lane concat
    attn = (jnp.dot(p[0:BN], v * m0, preferred_element_type=f32)
            + jnp.dot(p[BN:2 * BN], v * m1, preferred_element_type=f32)) # (BN, C)

    # --- out_conv with wo folded in, 2 matmuls: AW = attn @ [W1 | W2]; global path via m_avg ---
    aw = jnp.dot(attn, w_og, preferred_element_type=f32)                 # (BN, 2C)
    t = _gelu_exact(aw[:, 0:C]
                    + jnp.dot(m_avg, aw[:, C:2 * C], preferred_element_type=f32))  # (BN, C)

    # --- final Linear(C, 1) + Tanh, as a lane-dense (1, BN) row (no t.T materialized) ---
    o_ref[...] = jnp.tanh(jax.lax.dot_general(w4r, t, (((1,), (1,)), ((), ())),
                                              preferred_element_type=f32))


@jax.jit
def predictor_lg(x, param_slab):
    Bb, Nn, Dd = x.shape
    x2d = x.reshape(Bb * Nn, Dd)
    vmem = pl.BlockSpec(memory_space=pltpu.MemorySpace.VMEM)
    out_row = pl.pallas_call(
        predictor_lg_kernel,
        out_shape=jax.ShapeDtypeStruct((1, Bb * Nn), jnp.float32),
        in_specs=[vmem, vmem],
        out_specs=vmem,
    )(x2d, param_slab)
    return out_row.reshape(Bb, Nn, 1)


# ---------------- host-side parameter packing / folding into one (rows, 128) slab ----------------
def pack_params(raw):
    ln_w, ln_b, w_in, wq, wk, wv, wo, w3, w4 = raw
    scale = 1.0 / (HEAD_DIM ** 0.5)

    w_qkv = jnp.concatenate([wq * scale, wk, wv], axis=1)                 # (C, 3C)
    w1 = wo @ w3[:C]                                                      # local path  (C, C)
    w2 = wo @ w3[C:]                                                      # global path (C, C)
    w_og = jnp.concatenate([w1, w2], axis=1)                              # (C, 2C)

    lane = jnp.arange(C)
    m0 = (lane < HEAD_DIM).astype(jnp.float32)                            # (C,)
    m1 = (lane >= HEAD_DIM).astype(jnp.float32)                           # (C,)

    r = jnp.arange(2 * BN)[:, None]
    c = jnp.arange(BN)[None, :]
    bias2 = jnp.where(((r % BN) // N) == (c // N), 0.0, -1e30).astype(jnp.float32)  # (2BN, BN)

    ri = jnp.arange(BN)[:, None]
    ci = jnp.arange(BN)[None, :]
    m_avg = jnp.where((ri // N) == (ci // N), 1.0 / N, 0.0).astype(jnp.float32)     # (BN, BN)

    def pad_lanes(a):
        out = jnp.zeros((a.shape[0], SLAB_W), jnp.float32)
        return out.at[:, :a.shape[1]].set(a.astype(jnp.float32))

    misc = jnp.zeros((8, SLAB_W), jnp.float32)
    misc = misc.at[0, :EMBED_DIM].set(ln_w.reshape(-1))
    misc = misc.at[1, :EMBED_DIM].set(ln_b.reshape(-1))
    misc = misc.at[2, :C].set(w4.reshape(-1))
    misc = misc.at[3, :C].set(m0)
    misc = misc.at[4, :C].set(m1)

    slab = jnp.concatenate(
        [misc, pad_lanes(w_in), pad_lanes(w_qkv), pad_lanes(w_og),
         pad_lanes(bias2), pad_lanes(m_avg)], axis=0)
    assert slab.shape == (SLAB_ROWS, SLAB_W), slab.shape
    return slab


# ---------------- pure-JAX reference (matches the PyTorch module) ----------------
def predictor_lg_ref(x, raw):
    ln_w, ln_b, w_in, wq, wk, wv, wo, w3, w4 = raw
    mu = jnp.mean(x, axis=-1, keepdims=True)
    var = jnp.mean((x - mu) ** 2, axis=-1, keepdims=True)
    xn = (x - mu) / jnp.sqrt(var + LN_EPS) * ln_w + ln_b
    h = _gelu_exact(xn @ w_in)                                            # (B, N, C)

    q = (h @ wq).reshape(B, N, NUM_HEADS, HEAD_DIM).transpose(0, 2, 1, 3)
    k = (h @ wk).reshape(B, N, NUM_HEADS, HEAD_DIM).transpose(0, 2, 1, 3)
    v = (h @ wv).reshape(B, N, NUM_HEADS, HEAD_DIM).transpose(0, 2, 1, 3)
    attn = jax.nn.softmax(q @ k.transpose(0, 1, 3, 2) / HEAD_DIM ** 0.5, axis=-1)
    a = (attn @ v).transpose(0, 2, 1, 3).reshape(B, N, C) @ wo

    g = jnp.mean(a, axis=1, keepdims=True)
    cat = jnp.concatenate([a, jnp.broadcast_to(g, a.shape)], axis=-1)
    t = _gelu_exact(cat @ w3)
    return jnp.tanh(t @ w4)


def make_params(key):
    ks = jax.random.split(key, 9)
    scale = 0.05
    ln_w = 1.0 + 0.1 * jax.random.normal(ks[7], (1, EMBED_DIM), jnp.float32)
    ln_b = 0.05 * jax.random.normal(ks[8], (1, EMBED_DIM), jnp.float32)
    w_in = scale * jax.random.normal(ks[0], (EMBED_DIM, C), jnp.float32)
    wq = scale * jax.random.normal(ks[1], (C, C), jnp.float32)
    wk = scale * jax.random.normal(ks[2], (C, C), jnp.float32)
    wv = scale * jax.random.normal(ks[3], (C, C), jnp.float32)
    wo = scale * jax.random.normal(ks[4], (C, C), jnp.float32)
    w3 = scale * jax.random.normal(ks[5], (2 * C, C), jnp.float32)
    w4 = scale * jax.random.normal(ks[6], (C, 1), jnp.float32)
    return (ln_w, ln_b, w_in, wq, wk, wv, wo, w3, w4)


if __name__ == "__main__":
    key = jax.random.PRNGKey(0)
    kx, kp = jax.random.split(key)
    x = jax.random.normal(kx, (B, N, EMBED_DIM), jnp.float32)
    raw = make_params(kp)
    slab = pack_params(raw)

    out = predictor_lg(x, slab)
    out = jax.block_until_ready(out)

    ref = predictor_lg_ref(x, raw)
    assert out.shape == (B, N, 1), out.shape
    max_err = float(jnp.max(jnp.abs(out - ref)))
    # exact-divide softmax keeps the only reassociation to the host-side wo / scale folding
    assert jnp.allclose(out, ref, atol=1e-4, rtol=1e-4), max_err
    print("KERNEL_OK")
</pallas_src>

<mosaic_0001>
module attributes {stable_mosaic.version = 11 : i64} {
  func.func @predictor_lg_kernel(%arg0: memref<16x64xf32, #tpu.memory_space<vmem>>, %arg1: memref<184x128xf32, #tpu.memory_space<vmem>>, %arg2: memref<1x16xf32, #tpu.memory_space<vmem>>) attributes {dimension_semantics = [], scalar_prefetch = 0 : i64, scratch_operands = 0 : i64, tpu.core_type = #tpu.core_type<tc>} {
    %c0 = arith.constant 0 : index
    %c0_0 = arith.constant 0 : index
    %0 = vector.load %arg0[%c0, %c0_0] : memref<16x64xf32, #tpu.memory_space<vmem>>, vector<16x64xf32>
    %c0_1 = arith.constant 0 : index
    %c0_2 = arith.constant 0 : index
    %1 = vector.load %arg1[%c0_1, %c0_2] : memref<184x128xf32, #tpu.memory_space<vmem>>, vector<1x64xf32>
    %c1 = arith.constant 1 : index
    %c0_3 = arith.constant 0 : index
    %2 = vector.load %arg1[%c1, %c0_3] : memref<184x128xf32, #tpu.memory_space<vmem>>, vector<1x64xf32>
    %c2 = arith.constant 2 : index
    %c0_4 = arith.constant 0 : index
    %3 = vector.load %arg1[%c2, %c0_4] : memref<184x128xf32, #tpu.memory_space<vmem>>, vector<1x32xf32>
    %c3 = arith.constant 3 : index
    %c0_5 = arith.constant 0 : index
    %4 = vector.load %arg1[%c3, %c0_5] : memref<184x128xf32, #tpu.memory_space<vmem>>, vector<1x32xf32>
    %c4 = arith.constant 4 : index
    %c0_6 = arith.constant 0 : index
    %5 = vector.load %arg1[%c4, %c0_6] : memref<184x128xf32, #tpu.memory_space<vmem>>, vector<1x32xf32>
    %c8 = arith.constant 8 : index
    %c0_7 = arith.constant 0 : index
    %6 = vector.load %arg1[%c8, %c0_7] : memref<184x128xf32, #tpu.memory_space<vmem>>, vector<64x32xf32>
    %c72 = arith.constant 72 : index
    %c0_8 = arith.constant 0 : index
    %7 = vector.load %arg1[%c72, %c0_8] : memref<184x128xf32, #tpu.memory_space<vmem>>, vector<32x96xf32>
    %c104 = arith.constant 104 : index
    %c0_9 = arith.constant 0 : index
    %8 = vector.load %arg1[%c104, %c0_9] : memref<184x128xf32, #tpu.memory_space<vmem>>, vector<32x64xf32>
    %c136 = arith.constant 136 : index
    %c0_10 = arith.constant 0 : index
    %9 = vector.load %arg1[%c136, %c0_10] : memref<184x128xf32, #tpu.memory_space<vmem>>, vector<32x16xf32>
    %c168 = arith.constant 168 : index
    %c0_11 = arith.constant 0 : index
    %10 = vector.load %arg1[%c168, %c0_11] : memref<184x128xf32, #tpu.memory_space<vmem>>, vector<16x16xf32>
    %cst = arith.constant dense<0.000000e+00> : vector<16xf32>
    %11 = vector.multi_reduction <add>, %0, %cst [1] : vector<16x64xf32> to vector<16xf32>
    %12 = vector.shape_cast %11 : vector<16xf32> to vector<16x1xf32>
    %cst_12 = arith.constant 6.400000e+01 : f32
    %13 = vector.broadcast %cst_12 : f32 to vector<16x1xf32>
    %14 = arith.divf %12, %13 : vector<16x1xf32>
    %15 = vector.broadcast %14 : vector<16x1xf32> to vector<16x64xf32>
    %16 = arith.subf %0, %15 : vector<16x64xf32>
    %17 = arith.mulf %16, %16 : vector<16x64xf32>
    %cst_13 = arith.constant dense<0.000000e+00> : vector<16xf32>
    %18 = vector.multi_reduction <add>, %17, %cst_13 [1] : vector<16x64xf32> to vector<16xf32>
    %19 = vector.shape_cast %18 : vector<16xf32> to vector<16x1xf32>
    %cst_14 = arith.constant 6.400000e+01 : f32
    %20 = vector.broadcast %cst_14 : f32 to vector<16x1xf32>
    %21 = arith.divf %19, %20 : vector<16x1xf32>
    %cst_15 = arith.constant 9.99999974E-6 : f32
    %22 = vector.broadcast %cst_15 : f32 to vector<16x1xf32>
    %23 = arith.addf %21, %22 : vector<16x1xf32>
    %24 = math.rsqrt %23 : vector<16x1xf32>
    %25 = vector.broadcast %24 : vector<16x1xf32> to vector<16x64xf32>
    %26 = arith.mulf %16, %25 : vector<16x64xf32>
    %27 = vector.broadcast %1 : vector<1x64xf32> to vector<16x64xf32>
    %28 = arith.mulf %26, %27 : vector<16x64xf32>
    %29 = vector.broadcast %2 : vector<1x64xf32> to vector<16x64xf32>
    %30 = arith.addf %28, %29 : vector<16x64xf32>
    %cst_16 = arith.constant dense<0.000000e+00> : vector<16x32xf32>
    %31 = tpu.matmul %30, %6, %cst_16 {dimension_numbers = #tpu.dot_dimension_numbers<[1], [0], [0], [1], [0, 0, 1, 1], [], []>} : vector<16x64xf32>, vector<64x32xf32>, vector<16x32xf32> -> vector<16x32xf32>
    %cst_17 = arith.constant 5.000000e-01 : f32
    %32 = vector.broadcast %cst_17 : f32 to vector<16x32xf32>
    %33 = arith.mulf %32, %31 : vector<16x32xf32>
    %cst_18 = arith.constant 2.000000e+00 : f32
    %34 = math.sqrt %cst_18 : f32
    %cst_19 = arith.constant 1.000000e+00 : f32
    %35 = arith.divf %cst_19, %34 : f32
    %36 = vector.broadcast %35 : f32 to vector<16x32xf32>
    %37 = arith.mulf %31, %36 : vector<16x32xf32>
    %38 = math.erf %37 : vector<16x32xf32>
    %cst_20 = arith.constant 1.000000e+00 : f32
    %39 = vector.broadcast %cst_20 : f32 to vector<16x32xf32>
    %40 = arith.addf %39, %38 : vector<16x32xf32>
    %41 = arith.mulf %33, %40 : vector<16x32xf32>
    %cst_21 = arith.constant dense<0.000000e+00> : vector<16x96xf32>
    %42 = tpu.matmul %41, %7, %cst_21 {dimension_numbers = #tpu.dot_dimension_numbers<[1], [0], [0], [1], [0, 0, 1, 1], [], []>} : vector<16x32xf32>, vector<32x96xf32>, vector<16x96xf32> -> vector<16x96xf32>
    %43 = vector.extract_strided_slice %42 {offsets = [0, 0], sizes = [16, 32], strides = [1, 1]} : vector<16x96xf32> to vector<16x32xf32>
    %44 = vector.extract_strided_slice %42 {offsets = [0, 32], sizes = [16, 32], strides = [1, 1]} : vector<16x96xf32> to vector<16x32xf32>
    %45 = vector.extract_strided_slice %42 {offsets = [0, 64], sizes = [16, 32], strides = [1, 1]} : vector<16x96xf32> to vector<16x32xf32>
    %46 = vector.broadcast %4 : vector<1x32xf32> to vector<16x32xf32>
    %47 = arith.mulf %43, %46 : vector<16x32xf32>
    %48 = vector.broadcast %5 : vector<1x32xf32> to vector<16x32xf32>
    %49 = arith.mulf %43, %48 : vector<16x32xf32>
    %50 = tpu.concatenate %47, %49 in 0 : vector<16x32xf32>, vector<16x32xf32> -> vector<32x32xf32>
    %cst_22 = arith.constant dense<0.000000e+00> : vector<32x16xf32>
    %51 = tpu.matmul %50, %44, %cst_22 {dimension_numbers = #tpu.dot_dimension_numbers<[1], [1], [0], [0], [0, 0, 1, 0], [], []>} : vector<32x32xf32>, vector<16x32xf32>, vector<32x16xf32> -> vector<32x16xf32>
    %52 = arith.addf %51, %9 : vector<32x16xf32>
    %cst_23 = arith.constant dense<0xFF800000> : vector<32xf32>
    %53 = vector.multi_reduction <maximumf>, %52, %cst_23 [1] : vector<32x16xf32> to vector<32xf32>
    %54 = vector.shape_cast %53 : vector<32xf32> to vector<32x1xf32>
    %55 = vector.broadcast %54 : vector<32x1xf32> to vector<32x16xf32>
    %56 = arith.subf %52, %55 : vector<32x16xf32>
    %57 = math.exp %56 : vector<32x16xf32>
    %cst_24 = arith.constant dense<0.000000e+00> : vector<32xf32>
    %58 = vector.multi_reduction <add>, %57, %cst_24 [1] : vector<32x16xf32> to vector<32xf32>
    %59 = vector.shape_cast %58 : vector<32xf32> to vector<32x1xf32>
    %60 = vector.broadcast %59 : vector<32x1xf32> to vector<32x16xf32>
    %61 = arith.divf %57, %60 : vector<32x16xf32>
    %62 = vector.extract_strided_slice %61 {offsets = [0, 0], sizes = [16, 16], strides = [1, 1]} : vector<32x16xf32> to vector<16x16xf32>
    %63 = vector.broadcast %4 : vector<1x32xf32> to vector<16x32xf32>
    %64 = arith.mulf %45, %63 : vector<16x32xf32>
    %cst_25 = arith.constant dense<0.000000e+00> : vector<16x32xf32>
    %65 = tpu.matmul %62, %64, %cst_25 {dimension_numbers = #tpu.dot_dimension_numbers<[1], [0], [0], [1], [0, 0, 1, 1], [], []>} : vector<16x16xf32>, vector<16x32xf32>, vector<16x32xf32> -> vector<16x32xf32>
    %66 = vector.extract_strided_slice %61 {offsets = [16, 0], sizes = [16, 16], strides = [1, 1]} : vector<32x16xf32> to vector<16x16xf32>
    %67 = vector.broadcast %5 : vector<1x32xf32> to vector<16x32xf32>
    %68 = arith.mulf %45, %67 : vector<16x32xf32>
    %cst_26 = arith.constant dense<0.000000e+00> : vector<16x32xf32>
    %69 = tpu.matmul %66, %68, %cst_26 {dimension_numbers = #tpu.dot_dimension_numbers<[1], [0], [0], [1], [0, 0, 1, 1], [], []>} : vector<16x16xf32>, vector<16x32xf32>, vector<16x32xf32> -> vector<16x32xf32>
    %70 = arith.addf %65, %69 : vector<16x32xf32>
    %cst_27 = arith.constant dense<0.000000e+00> : vector<16x64xf32>
    %71 = tpu.matmul %70, %8, %cst_27 {dimension_numbers = #tpu.dot_dimension_numbers<[1], [0], [0], [1], [0, 0, 1, 1], [], []>} : vector<16x32xf32>, vector<32x64xf32>, vector<16x64xf32> -> vector<16x64xf32>
    %72 = vector.extract_strided_slice %71 {offsets = [0, 0], sizes = [16, 32], strides = [1, 1]} : vector<16x64xf32> to vector<16x32xf32>
    %73 = vector.extract_strided_slice %71 {offsets = [0, 32], sizes = [16, 32], strides = [1, 1]} : vector<16x64xf32> to vector<16x32xf32>
    %cst_28 = arith.constant dense<0.000000e+00> : vector<16x32xf32>
    %74 = tpu.matmul %10, %73, %cst_28 {dimension_numbers = #tpu.dot_dimension_numbers<[1], [0], [0], [1], [0, 0, 1, 1], [], []>} : vector<16x16xf32>, vector<16x32xf32>, vector<16x32xf32> -> vector<16x32xf32>
    %75 = arith.addf %72, %74 : vector<16x32xf32>
    %cst_29 = arith.constant 5.000000e-01 : f32
    %76 = vector.broadcast %cst_29 : f32 to vector<16x32xf32>
    %77 = arith.mulf %76, %75 : vector<16x32xf32>
    %cst_30 = arith.constant 2.000000e+00 : f32
    %78 = math.sqrt %cst_30 : f32
    %cst_31 = arith.constant 1.000000e+00 : f32
    %79 = arith.divf %cst_31, %78 : f32
    %80 = vector.broadcast %79 : f32 to vector<16x32xf32>
    %81 = arith.mulf %75, %80 : vector<16x32xf32>
    %82 = math.erf %81 : vector<16x32xf32>
    %cst_32 = arith.constant 1.000000e+00 : f32
    %83 = vector.broadcast %cst_32 : f32 to vector<16x32xf32>
    %84 = arith.addf %83, %82 : vector<16x32xf32>
    %85 = arith.mulf %77, %84 : vector<16x32xf32>
    %cst_33 = arith.constant dense<0.000000e+00> : vector<1x16xf32>
    %86 = tpu.matmul %3, %85, %cst_33 {dimension_numbers = #tpu.dot_dimension_numbers<[1], [1], [0], [0], [0, 0, 1, 0], [], []>} : vector<1x32xf32>, vector<16x32xf32>, vector<1x16xf32> -> vector<1x16xf32>
    %87 = math.tanh %86 : vector<1x16xf32>
    %c0_34 = arith.constant 0 : index
    %c0_35 = arith.constant 0 : index
    %88 = vector.load %arg2[%c0_34, %c0_35] : memref<1x16xf32, #tpu.memory_space<vmem>>, vector<1x16xf32>
    tpu.vector_store %arg2[%c0_34, %c0_35], %87 {strides = array<i32>} : memref<1x16xf32, #tpu.memory_space<vmem>>, vector<1x16xf32>,
    return
  }
}

</mosaic_0001>

<llo_original>
// kernel: predictor_lg.1
$region0: #{predictor_lg.1}
  #allocation0 [shape = 'u32[]', space=smem, size = 0x4, offset = 0x4, fixed_abs, tag = 'smem constant byte address 0x4 - core index']
  #allocation1 [shape = 'u32[144,128]{1,0:T(1,128)}', space=vmem, size = 0x12000, scoped, tag = 'internal scratch']
  %s0 = inlined_call_operand.hbm [shape: f32[16,64], index: 0, kind: input, shape index: {}]
  %s1 = inlined_call_operand.hbm [shape: f32[184,128], index: 1, kind: input, shape index: {}]
  %s2 = inlined_call_operand.vmem [shape: f32[1,16], index: 2, kind: output, shape index: {}]
  %s3 = sld [smem:[#allocation0]]
  $region26: #{predictor_lg.1} parent=0
    _
  %s5 = ssub.s32 1, %s3
  %s6 = scalar_select 0, %s5, %s3
  $region1: #{predictor_lg.1} parent=0
    #allocation2 [shape = 'u8[8192]{0}', space=vmem, size = 0x2000, scoped, tag = 'input window, operand 0, single buffered']
    #allocation3 [shape = 's32[1]{0}', space=sflag, size = 0x4, scoped, tag = 'scoped memory for predictor_lg.1']
    #allocation4 [shape = 'u8[94208]{0}', space=vmem, size = 0x17000, scoped, tag = 'input window, operand 1, single buffered']
    #allocation5 [shape = 's32[1]{0}', space=sflag, size = 0x4, scoped, tag = 'scoped memory for predictor_lg.1']
    %7 = vsyncpa [#allocation3], 0
    %8 = vsyncpa [#allocation5], 0
    // Predicated region
    $region2: #{predictor_lg.1} parent=1 // pred_check
      _
    $region3: #{predictor_lg.1} parent=1 // pred_check_branch
      %10 = sbr.rel (0) target = $region5
    $region4: #{predictor_lg.1} parent=1 // pred_region
      %s12 = ssub.s32 256, 256
      %13 = vsyncadd [#allocation3], %s12
      %s14 = sshll.u32 [#allocation2], 4
      %s15 = int_to_ptr.vmem [resolvable:$true] %s14
      %20 = dma.hbm_to_vmem [thread:$0]  %s0, 256, %s15, [#allocation3], 128, 128, 8
    $region5: #{predictor_lg.1} parent=1 // pred_fallthru
      _
    // Predicated region
    $region6: #{predictor_lg.1} parent=1 // pred_check
      _
    $region7: #{predictor_lg.1} parent=1 // pred_check_branch
      %22 = sbr.rel (0) target = $region9
    $region8: #{predictor_lg.1} parent=1 // pred_region
      %s24 = ssub.s32 2944, 2944
      %25 = vsyncadd [#allocation5], %s24
      %s26 = sshll.u32 [#allocation4], 4
      %s27 = int_to_ptr.vmem [resolvable:$true] %s26
      %32 = dma.hbm_to_vmem [thread:$0]  %s1, 2944, %s27, [#allocation5], 128, 128, 8
    $region9: #{predictor_lg.1} parent=1 // pred_fallthru
      _
    // Predicated region
    $region10: #{predictor_lg.1} parent=1 // pred_check
      _
    $region11: #{predictor_lg.1} parent=1 // pred_check_branch
      %34 = sbr.rel (0) target = $region13
    $region12: #{predictor_lg.1} parent=1 // pred_region
      %35 = dma.done [#allocation3], 256
    $region13: #{predictor_lg.1} parent=1 // pred_fallthru
      _
    // Predicated region
    $region14: #{predictor_lg.1} parent=1 // pred_check
      _
    $region15: #{predictor_lg.1} parent=1 // pred_check_branch
      %37 = sbr.rel (0) target = $region17
    $region16: #{predictor_lg.1} parent=1 // pred_region
      %38 = dma.done [#allocation5], 2944
    $region17: #{predictor_lg.1} parent=1 // pred_fallthru
      _
    %v39 = vld [vmem:[#allocation2] sm:$0xff]
    %v40 = vld [vmem:[#allocation2 + $0x8] sm:$0xff]
    %v41 = vld [vmem:[#allocation4] sm:$0x1]
    %v42 = vld [vmem:[#allocation4 + $0x1] sm:$0x1]
    %v43 = vld [vmem:[#allocation4 + $0x2] sm:$0x1]
    %v44 = vld [vmem:[#allocation4 + $0x3] sm:$0x1]
    %v45 = vld [vmem:[#allocation4 + $0x4] sm:$0x1]
    %v46 = vld [vmem:[#allocation4 + $0x8] sm:$0xff]
    %v47 = vld [vmem:[#allocation4 + $0x10] sm:$0xff]
    %v48 = vld [vmem:[#allocation4 + $0x18] sm:$0xff]
    %v49 = vld [vmem:[#allocation4 + $0x20] sm:$0xff]
    %v50 = vld [vmem:[#allocation4 + $0x28] sm:$0xff]
    %v51 = vld [vmem:[#allocation4 + $0x30] sm:$0xff]
    %v52 = vld [vmem:[#allocation4 + $0x38] sm:$0xff]
    %v53 = vld [vmem:[#allocation4 + $0x40] sm:$0xff]
    %v54 = vld [vmem:[#allocation4 + $0x48] sm:$0xff]
    %v55 = vld [vmem:[#allocation4 + $0x50] sm:$0xff]
    %v56 = vld [vmem:[#allocation4 + $0x58] sm:$0xff]
    %v57 = vld [vmem:[#allocation4 + $0x60] sm:$0xff]
    %v58 = vld [vmem:[#allocation4 + $0x68] sm:$0xff]
    %v59 = vld [vmem:[#allocation4 + $0x70] sm:$0xff]
    %v60 = vld [vmem:[#allocation4 + $0x78] sm:$0xff]
    %v61 = vld [vmem:[#allocation4 + $0x80] sm:$0xff]
    %v62 = vld [vmem:[#allocation4 + $0x88] sm:$0xff]
    %v63 = vld [vmem:[#allocation4 + $0x90] sm:$0xff]
    %v64 = vld [vmem:[#allocation4 + $0x98] sm:$0xff]
    %v65 = vld [vmem:[#allocation4 + $0xa0] sm:$0xff]
    %v66 = vld [vmem:[#allocation4 + $0xa8] sm:$0xff]
    %v67 = vld [vmem:[#allocation4 + $0xb0] sm:$0xff]
    %vm68 = vcmask 523264
    %v69 = vsel %vm68, %v39, 0.0
    %70 = vadd.xlane.f32.xlu0 %v69
    %v71 = vpop.xlane.xlu0 %70
    %v72 = vsel %vm68, %v40, 0.0
    %73 = vadd.xlane.f32.xlu0 %v72
    %v74 = vpop.xlane.xlu0 %73
    %v75 = vrcp.pop 64.0
    %v76 = vmul.f32 %v71, %v75
    %v77 = vmul.f32 %v74, %v75
    %v78 = vsub.f32 %v39, %v76
    %v79 = vsub.f32 %v40, %v77
    %v80 = vmul.f32 %v78, %v78
    %v81 = vmul.f32 %v79, %v79
    %v82 = vsel %vm68, %v80, 0.0
    %83 = vadd.xlane.f32.xlu0 %v82
    %v84 = vpop.xlane.xlu0 %83
    %v85 = vsel %vm68, %v81, 0.0
    %86 = vadd.xlane.f32.xlu0 %v85
    %v87 = vpop.xlane.xlu0 %86
    %v88 = vmul.f32 %v84, %v75
    %v89 = vmul.f32 %v87, %v75
    %v90 = vadd.f32 %v88, 1e-05
    %v91 = vadd.f32 %v89, 1e-05
    %v92 = vrsqrt.pop %v90
    %v93 = vrsqrt.pop %v91
    %v94 = vmul.f32 %v78, %v92
    %v95 = vmul.f32 %v79, %v93
    %v96 = vlaneseq
    %v97 = vshrl.u32 %v96, 7
    %v98 = vsub.s32 0, %v97
    %v99 = vrot.slane %v41, %v98
    %v100 = vmul.f32 %v94, %v99
    %v101 = vmul.f32 %v95, %v99
    %v102 = vlaneseq
    %v103 = vshrl.u32 %v102, 7
    %v104 = vsub.s32 0, %v103
    %v105 = vrot.slane %v42, %v104
    %v106 = vadd.f32 %v100, %v105
    %v107 = vadd.f32 %v101, %v105
    %v109 = vsel %vm68, %v106, 0
    %v112 = vsel %vm68, %v107, 0
    %114 = vmatprep.subr.mxu0 0.0
    %115 = vmatpush1.msra.mxu0 %v46
    %116 = vmatprep.subr.mxu0 0.0
    %117 = vmatpush1.msra.mxu0 %v47
    %118 = vmatprep.subr.mxu0 0.0
    %119 = vmatpush1.msra.mxu0 %v48
    %120 = vmatprep.subr.mxu0 0.0
    %121 = vmatpush1.msra.mxu0 %v49
    %122 = vmatprep.subr.mxu0 0.0
    %123 = vmatpush1.msra.mxu0 %v50
    %124 = vmatprep.subr.mxu0 0.0
    %125 = vmatpush1.msra.mxu0 %v51
    %126 = vmatprep.subr.mxu0 0.0
    %127 = vmatpush1.msra.mxu0 %v52
    %128 = vmatprep.subr.mxu0 0.0
    %129 = vmatpush1.msra.mxu0 %v53
    %130 = vmatprep.subr.mxu0 0.0
    %131 = vmatpush1.msra.mxu0 0.0
    %132 = vmatprep.subr.mxu0 0.0
    %133 = vmatpush1.msra.mxu0 0.0
    %134 = vmatprep.subr.mxu0 0.0
    %135 = vmatpush1.msra.mxu0 0.0
    %136 = vmatprep.subr.mxu0 0.0
    %137 = vmatpush1.msra.mxu0 0.0
    %138 = vmatprep.subr.mxu0 0.0
    %139 = vmatpush1.msra.mxu0 0.0
    %140 = vmatprep.subr.mxu0 0.0
    %141 = vmatpush1.msra.mxu0 0.0
    %142 = vmatprep.subr.mxu0 0.0
    %143 = vmatpush1.msra.mxu0 0.0
    %144 = vmatprep.subr.mxu0 0.0
    %145 = vmatpush1.msra.mxu0 0.0
    %146 = vmatprep.subr.mxu0 0.0
    %147 = vmatpush1.msra.mxu0 0.0
    %148 = vmatprep.subr.mxu0 0.0
    %149 = vmatpush1.msra.mxu0 0.0
    %150 = vmatprep.subr.mxu0 0.0
    %151 = vmatpush1.msra.mxu0 0.0
    %152 = vmatprep.subr.mxu0 0.0
    %153 = vmatpush1.msra.mxu0 0.0
    %154 = vmatprep.subr.mxu0 0.0
    %155 = vmatpush1.msra.mxu0 0.0
    %156 = vmatprep.subr.mxu0 0.0
    %157 = vmatpush1.msra.mxu0 0.0
    %158 = vmatprep.subr.mxu0 0.0
    %159 = vmatpush1.msra.mxu0 0.0
    %160 = vmatprep.subr.mxu0 0.0
    %161 = vmatpush1.msra.mxu0 0.0
    %162 = vmatprep.subr.mxu0 0.0
    %163 = vmatpush1.msra.mxu0 0.0
    %164 = vmatprep.subr.mxu0 0.0
    %165 = vmatpush1.msra.mxu0 0.0
    %166 = vmatprep.subr.mxu0 0.0
    %167 = vmatpush1.msra.mxu0 0.0
    %168 = vmatprep.subr.mxu0 0.0
    %169 = vmatpush1.msra.mxu0 0.0
    %170 = vmatprep.subr.mxu0 0.0
    %171 = vmatpush1.msra.mxu0 0.0
    %172 = vmatprep.subr.mxu0 0.0
    %173 = vmatpush1.msra.mxu0 0.0
    %174 = vmatprep.subr.mxu0 0.0
    %175 = vmatpush1.msra.mxu0 0.0
    %176 = vmatprep.subr.mxu0 0.0
    %177 = vmatpush1.msra.mxu0 0.0
    %178 = vmatprep.mubr.f32.mxu0 0.0
    %179 = vmatmul.mubr.f32.gmra.mrb[0].mxu0 %v109
    %v180 = vpop.f32.mrb[0].mxu0
    %v181 = vadd.f32 0.0, %v180
    %v182 = vpop.f32.mrb[0].mxu0
    %183 = vmatprep.mubr.f32.mxu0 0.0
    %184 = vmatmul.mubr.f32.gmra.mrb[0].mxu0 %v112
    %v185 = vpop.f32.mrb[0].mxu0
    %v186 = vadd.f32 0.0, %v185
    %v187 = vpop.f32.mrb[0].mxu0
    %188 = vdwg.mxu0
    %v189 = vmul.f32 %v181, 0.5
    %v190 = vmul.f32 %v186, 0.5
    %v191 = vmul.f32 %v181, 0.70710677
    %v192 = vmul.f32 %v186, 0.70710677
    %v193 = verf.f32.pop %v191
    %v194 = verf.f32.pop %v192
    %v195 = vadd.f32 %v193, 1.0
    %v196 = vadd.f32 %v194, 1.0
    %v197 = vmul.f32 %v189, %v195
    %v198 = vmul.f32 %v190, %v196
    %vm199 = vcmask 261120
    %v201 = vsel %vm199, %v197, 0
    %v204 = vsel %vm199, %v198, 0
    %206 = vmatprep.subr.mxu0 0.0
    %207 = vmatpush1.msra.mxu0 %v54
    %208 = vmatprep.subr.mxu0 0.0
    %209 = vmatpush1.msra.mxu0 %v55
    %210 = vmatprep.subr.mxu0 0.0
    %211 = vmatpush1.msra.mxu0 %v56
    %212 = vmatprep.subr.mxu0 0.0
    %213 = vmatpush1.msra.mxu0 %v57
    %214 = vmatprep.subr.mxu0 0.0
    %215 = vmatpush1.msra.mxu0 0.0
    %216 = vmatprep.subr.mxu0 0.0
    %217 = vmatpush1.msra.mxu0 0.0
    %218 = vmatprep.subr.mxu0 0.0
    %219 = vmatpush1.msra.mxu0 0.0
    %220 = vmatprep.subr.mxu0 0.0
    %221 = vmatpush1.msra.mxu0 0.0
    %222 = vmatprep.subr.mxu0 0.0
    %223 = vmatpush1.msra.mxu0 0.0
    %224 = vmatprep.subr.mxu0 0.0
    %225 = vmatpush1.msra.mxu0 0.0
    %226 = vmatprep.subr.mxu0 0.0
    %227 = vmatpush1.msra.mxu0 0.0
    %228 = vmatprep.subr.mxu0 0.0
    %229 = vmatpush1.msra.mxu0 0.0
    %230 = vmatprep.subr.mxu0 0.0
    %231 = vmatpush1.msra.mxu0 0.0
    %232 = vmatprep.subr.mxu0 0.0
    %233 = vmatpush1.msra.mxu0 0.0
    %234 = vmatprep.subr.mxu0 0.0
    %235 = vmatpush1.msra.mxu0 0.0
    %236 = vmatprep.subr.mxu0 0.0
    %237 = vmatpush1.msra.mxu0 0.0
    %238 = vmatprep.subr.mxu0 0.0
    %239 = vmatpush1.msra.mxu0 0.0
    %240 = vmatprep.subr.mxu0 0.0
    %241 = vmatpush1.msra.mxu0 0.0
    %242 = vmatprep.subr.mxu0 0.0
    %243 = vmatpush1.msra.mxu0 0.0
    %244 = vmatprep.subr.mxu0 0.0
    %245 = vmatpush1.msra.mxu0 0.0
    %246 = vmatprep.subr.mxu0 0.0
    %247 = vmatpush1.msra.mxu0 0.0
    %248 = vmatprep.subr.mxu0 0.0
    %249 = vmatpush1.msra.mxu0 0.0
    %250 = vmatprep.subr.mxu0 0.0
    %251 = vmatpush1.msra.mxu0 0.0
    %252 = vmatprep.subr.mxu0 0.0
    %253 = vmatpush1.msra.mxu0 0.0
    %254 = vmatprep.subr.mxu0 0.0
    %255 = vmatpush1.msra.mxu0 0.0
    %256 = vmatprep.subr.mxu0 0.0
    %257 = vmatpush1.msra.mxu0 0.0
    %258 = vmatprep.subr.mxu0 0.0
    %259 = vmatpush1.msra.mxu0 0.0
    %260 = vmatprep.subr.mxu0 0.0
    %261 = vmatpush1.msra.mxu0 0.0
    %262 = vmatprep.subr.mxu0 0.0
    %263 = vmatpush1.msra.mxu0 0.0
    %264 = vmatprep.subr.mxu0 0.0
    %265 = vmatpush1.msra.mxu0 0.0
    %266 = vmatprep.subr.mxu0 0.0
    %267 = vmatpush1.msra.mxu0 0.0
    %268 = vmatprep.subr.mxu0 0.0
    %269 = vmatpush1.msra.mxu0 0.0
    %270 = vmatprep.mubr.f32.mxu0 0.0
    %271 = vmatmul.mubr.f32.gmra.mrb[0].mxu0 %v201
    %v272 = vpop.f32.mrb[0].mxu0
    %v273 = vadd.f32 0.0, %v272
    %v274 = vpop.f32.mrb[0].mxu0
    %275 = vmatprep.mubr.f32.mxu0 0.0
    %276 = vmatmul.mubr.f32.gmra.mrb[0].mxu0 %v204
    %v277 = vpop.f32.mrb[0].mxu0
    %v278 = vadd.f32 0.0, %v277
    %v279 = vpop.f32.mrb[0].mxu0
    %280 = vdwg.mxu0
    %v281 = vlaneseq
    %v282 = vshrl.u32 %v281, 7
    %v283 = vsub.s32 0, %v282
    %v284 = vrot.slane %v44, %v283
    %v285 = vmul.f32 %v273, %v284
    %v286 = vmul.f32 %v278, %v284
    %v287 = vlaneseq
    %v288 = vshrl.u32 %v287, 7
    %v289 = vsub.s32 0, %v288
    %v290 = vrot.slane %v45, %v289
    %v291 = vmul.f32 %v273, %v290
    %v292 = vmul.f32 %v278, %v290
    %295 = vrot.lane.b32.xlu0 %v273, 96
    %v296 = vpop.permute.xlu0 %295
    %297 = vrot.lane.b32.xlu0 %v278, 96
    %v298 = vpop.permute.xlu0 %297
    %v300 = vsel %vm199, %v285, 0
    %v303 = vsel %vm199, %v286, 0
    %v306 = vsel %vm199, %v291, 0
    %v309 = vsel %vm199, %v292, 0
    %v311 = vsel %vm199, %v296, 0
    %v313 = vsel %vm199, %v298, 0
    %315 = vmatprep.subr.mxu0 0.0
    %316 = vmatpush1.xpose.msra.mxu0 %v311
    %317 = vmatprep.subr.mxu0 0.0
    %318 = vmatpush1.xpose.msra.mxu0 %v313
    %319 = vmatprep.subr.mxu0 0.0
    %320 = vmatpush1.xpose.msra.mxu0 0.0
    %321 = vmatprep.subr.mxu0 0.0
    %322 = vmatpush1.xpose.msra.mxu0 0.0
    %323 = vmatprep.subr.mxu0 0.0
    %324 = vmatpush1.xpose.msra.mxu0 0.0
    %325 = vmatprep.subr.mxu0 0.0
    %326 = vmatpush1.xpose.msra.mxu0 0.0
    %327 = vmatprep.subr.mxu0 0.0
    %328 = vmatpush1.xpose.msra.mxu0 0.0
    %329 = vmatprep.subr.mxu0 0.0
    %330 = vmatpush1.xpose.msra.mxu0 0.0
    %331 = vmatprep.subr.mxu0 0.0
    %332 = vmatpush1.xpose.msra.mxu0 0.0
    %333 = vmatprep.subr.mxu0 0.0
    %334 = vmatpush1.xpose.msra.mxu0 0.0
    %335 = vmatprep.subr.mxu0 0.0
    %336 = vmatpush1.xpose.msra.mxu0 0.0
    %337 = vmatprep.subr.mxu0 0.0
    %338 = vmatpush1.xpose.msra.mxu0 0.0
    %339 = vmatprep.subr.mxu0 0.0
    %340 = vmatpush1.xpose.msra.mxu0 0.0
    %341 = vmatprep.subr.mxu0 0.0
    %342 = vmatpush1.xpose.msra.mxu0 0.0
    %343 = vmatprep.subr.mxu0 0.0
    %344 = vmatpush1.xpose.msra.mxu0 0.0
    %345 = vmatprep.subr.mxu0 0.0
    %346 = vmatpush1.xpose.msra.mxu0 0.0
    %347 = vmatprep.subr.mxu0 0.0
    %348 = vmatpush1.xpose.msra.mxu0 0.0
    %349 = vmatprep.subr.mxu0 0.0
    %350 = vmatpush1.xpose.msra.mxu0 0.0
    %351 = vmatprep.subr.mxu0 0.0
    %352 = vmatpush1.xpose.msra.mxu0 0.0
    %353 = vmatprep.subr.mxu0 0.0
    %354 = vmatpush1.xpose.msra.mxu0 0.0
    %355 = vmatprep.subr.mxu0 0.0
    %356 = vmatpush1.xpose.msra.mxu0 0.0
    %357 = vmatprep.subr.mxu0 0.0
    %358 = vmatpush1.xpose.msra.mxu0 0.0
    %359 = vmatprep.subr.mxu0 0.0
    %360 = vmatpush1.xpose.msra.mxu0 0.0
    %361 = vmatprep.subr.mxu0 0.0
    %362 = vmatpush1.xpose.msra.mxu0 0.0
    %363 = vmatprep.subr.mxu0 0.0
    %364 = vmatpush1.xpose.msra.mxu0 0.0
    %365 = vmatprep.subr.mxu0 0.0
    %366 = vmatpush1.xpose.msra.mxu0 0.0
    %367 = vmatprep.subr.mxu0 0.0
    %368 = vmatpush1.xpose.msra.mxu0 0.0
    %369 = vmatprep.subr.mxu0 0.0
    %370 = vmatpush1.xpose.msra.mxu0 0.0
    %371 = vmatprep.subr.mxu0 0.0
    %372 = vmatpush1.xpose.msra.mxu0 0.0
    %373 = vmatprep.subr.mxu0 0.0
    %374 = vmatpush1.xpose.msra.mxu0 0.0
    %375 = vmatprep.subr.mxu0 0.0
    %376 = vmatpush1.xpose.msra.mxu0 0.0
    %377 = vmatprep.subr.mxu0 0.0
    %378 = vmatpush1.xpose.msra.mxu0 0.0
    %379 = vmatprep.mubr.f32.mxu0 0.0
    %380 = vmatmul.mubr.f32.gmra.mrb[0].mxu0 %v300
    %v381 = vpop.f32.mrb[0].mxu0
    %v382 = vadd.f32 %v62, %v381
    %v383 = vpop.f32.mrb[0].mxu0
    %384 = vmatprep.mubr.f32.mxu0 0.0
    %385 = vmatmul.mubr.f32.gmra.mrb[0].mxu0 %v303
    %v386 = vpop.f32.mrb[0].mxu0
    %v387 = vadd.f32 %v63, %v386
    %v388 = vpop.f32.mrb[0].mxu0
    %389 = vmatprep.mubr.f32.mxu0 0.0
    %390 = vmatmul.mubr.f32.gmra.mrb[0].mxu0 %v306
    %v391 = vpop.f32.mrb[0].mxu0
    %v392 = vadd.f32 %v64, %v391
    %v393 = vpop.f32.mrb[0].mxu0
    %394 = vmatprep.mubr.f32.mxu0 0.0
    %395 = vmatmul.mubr.f32.gmra.mrb[0].mxu0 %v309
    %v396 = vpop.f32.mrb[0].mxu0
    %v397 = vadd.f32 %v65, %v396
    %v398 = vpop.f32.mrb[0].mxu0
    %399 = vdwg.mxu0
    %vm400 = vcmask 130048
    %v401 = vsel %vm400, %v382, -inf
    %402 = vmax.xlane.f32.xlu0 %v401
    %v403 = vpop.xlane.xlu0 %402
    %v404 = vsel %vm400, %v387, -inf
    %405 = vmax.xlane.f32.xlu0 %v404
    %v406 = vpop.xlane.xlu0 %405
    %v407 = vsel %vm400, %v392, -inf
    %408 = vmax.xlane.f32.xlu0 %v407
    %v409 = vpop.xlane.xlu0 %408
    %v410 = vsel %vm400, %v397, -inf
    %411 = vmax.xlane.f32.xlu0 %v410
    %v412 = vpop.xlane.xlu0 %411
    %v413 = vsub.f32 %v382, %v403
    %v414 = vsub.f32 %v387, %v406
    %v415 = vsub.f32 %v392, %v409
    %v416 = vsub.f32 %v397, %v412
    %v417 = vmul.f32 %v413, 1.442695
    %v418 = vpow.pop %v417
    %v419 = vmul.f32 %v414, 1.442695
    %v420 = vpow.pop %v419
    %v421 = vmul.f32 %v415, 1.442695
    %v422 = vpow.pop %v421
    %v423 = vmul.f32 %v416, 1.442695
    %v424 = vpow.pop %v423
    %v425 = vsel %vm400, %v418, 0.0
    %426 = vadd.xlane.f32.xlu0 %v425
    %v427 = vpop.xlane.xlu0 %426
    %v428 = vsel %vm400, %v420, 0.0
    %429 = vadd.xlane.f32.xlu0 %v428
    %v430 = vpop.xlane.xlu0 %429
    %v431 = vsel %vm400, %v422, 0.0
    %432 = vadd.xlane.f32.xlu0 %v431
    %v433 = vpop.xlane.xlu0 %432
    %v434 = vsel %vm400, %v424, 0.0
    %435 = vadd.xlane.f32.xlu0 %v434
    %v436 = vpop.xlane.xlu0 %435
    %v437 = vrcp.pop %v427
    %v438 = vmul.f32 %v418, %v437
    %v439 = vrcp.pop %v430
    %v440 = vmul.f32 %v420, %v439
    %v441 = vrcp.pop %v433
    %v442 = vmul.f32 %v422, %v441
    %v443 = vrcp.pop %v436
    %v444 = vmul.f32 %v424, %v443
    %446 = vrot.lane.b32.xlu0 %v284, 64
    %v447 = vpop.permute.xlu0 %446
    %v449 = vmul.f32 %v273, %v447
    %v450 = vmul.f32 %v278, %v447
    %452 = vrot.lane.b32.xlu0 %v290, 64
    %v453 = vpop.permute.xlu0 %452
    %v455 = vmul.f32 %v273, %v453
    %v456 = vmul.f32 %v278, %v453
    %459 = vrot.lane.b32.xlu0 %v455, 64
    %v460 = vpop.permute.xlu0 %459
    %461 = vrot.lane.b32.xlu0 %v456, 64
    %v462 = vpop.permute.xlu0 %461
    %v466 = vsel %vm400, %v442, 0
    %v469 = vsel %vm400, %v444, 0
    %471 = vmatprep.subr.mxu0 0.0
    %472 = vmatpush1.msra.mxu0 %v460
    %473 = vmatprep.subr.mxu0 0.0
    %474 = vmatpush1.msra.mxu0 %v462
    %475 = vmatprep.subr.mxu0 0.0
    %476 = vmatpush1.msra.mxu0 0.0
    %477 = vmatprep.subr.mxu0 0.0
    %478 = vmatpush1.msra.mxu0 0.0
    %479 = vmatprep.subr.mxu0 0.0
    %480 = vmatpush1.msra.mxu0 0.0
    %481 = vmatprep.subr.mxu0 0.0
    %482 = vmatpush1.msra.mxu0 0.0
    %483 = vmatprep.subr.mxu0 0.0
    %484 = vmatpush1.msra.mxu0 0.0
    %485 = vmatprep.subr.mxu0 0.0
    %486 = vmatpush1.msra.mxu0 0.0
    %487 = vmatprep.subr.mxu0 0.0
    %488 = vmatpush1.msra.mxu0 0.0
    %489 = vmatprep.subr.mxu0 0.0
    %490 = vmatpush1.msra.mxu0 0.0
    %491 = vmatprep.subr.mxu0 0.0
    %492 = vmatpush1.msra.mxu0 0.0
    %493 = vmatprep.subr.mxu0 0.0
    %494 = vmatpush1.msra.mxu0 0.0
    %495 = vmatprep.subr.mxu0 0.0
    %496 = vmatpush1.msra.mxu0 0.0
    %497 = vmatprep.subr.mxu0 0.0
    %498 = vmatpush1.msra.mxu0 0.0
    %499 = vmatprep.subr.mxu0 0.0
    %500 = vmatpush1.msra.mxu0 0.0
    %501 = vmatprep.subr.mxu0 0.0
    %502 = vmatpush1.msra.mxu0 0.0
    %503 = vmatprep.subr.mxu0 0.0
    %504 = vmatpush1.msra.mxu0 0.0
    %505 = vmatprep.subr.mxu0 0.0
    %506 = vmatpush1.msra.mxu0 0.0
    %507 = vmatprep.subr.mxu0 0.0
    %508 = vmatpush1.msra.mxu0 0.0
    %509 = vmatprep.subr.mxu0 0.0
    %510 = vmatpush1.msra.mxu0 0.0
    %511 = vmatprep.subr.mxu0 0.0
    %512 = vmatpush1.msra.mxu0 0.0
    %513 = vmatprep.subr.mxu0 0.0
    %514 = vmatpush1.msra.mxu0 0.0
    %515 = vmatprep.subr.mxu0 0.0
    %516 = vmatpush1.msra.mxu0 0.0
    %517 = vmatprep.subr.mxu0 0.0
    %518 = vmatpush1.msra.mxu0 0.0
    %519 = vmatprep.subr.mxu0 0.0
    %520 = vmatpush1.msra.mxu0 0.0
    %521 = vmatprep.subr.mxu0 0.0
    %522 = vmatpush1.msra.mxu0 0.0
    %523 = vmatprep.subr.mxu0 0.0
    %524 = vmatpush1.msra.mxu0 0.0
    %525 = vmatprep.subr.mxu0 0.0
    %526 = vmatpush1.msra.mxu0 0.0
    %527 = vmatprep.subr.mxu0 0.0
    %528 = vmatpush1.msra.mxu0 0.0
    %529 = vmatprep.subr.mxu0 0.0
    %530 = vmatpush1.msra.mxu0 0.0
    %531 = vmatprep.subr.mxu0 0.0
    %532 = vmatpush1.msra.mxu0 0.0
    %533 = vmatprep.subr.mxu0 0.0
    %534 = vmatpush1.msra.mxu0 0.0
    %535 = vmatprep.mubr.f32.mxu0 0.0
    %536 = vmatmul.mubr.f32.gmra.mrb[0].mxu0 %v466
    %v537 = vpop.f32.mrb[0].mxu0
    %v538 = vadd.f32 0.0, %v537
    %v539 = vpop.f32.mrb[0].mxu0
    %540 = vmatprep.mubr.f32.mxu0 0.0
    %541 = vmatmul.mubr.f32.gmra.mrb[0].mxu0 %v469
    %v542 = vpop.f32.mrb[0].mxu0
    %v543 = vadd.f32 0.0, %v542
    %v544 = vpop.f32.mrb[0].mxu0
    %545 = vdwg.mxu0
    %548 = vrot.lane.b32.xlu0 %v449, 64
    %v549 = vpop.permute.xlu0 %548
    %550 = vrot.lane.b32.xlu0 %v450, 64
    %v551 = vpop.permute.xlu0 %550
    %v555 = vsel %vm400, %v438, 0
    %v558 = vsel %vm400, %v440, 0
    %560 = vmatprep.subr.mxu0 0.0
    %561 = vmatpush1.msra.mxu0 %v549
    %562 = vmatprep.subr.mxu0 0.0
    %563 = vmatpush1.msra.mxu0 %v551
    %564 = vmatprep.subr.mxu0 0.0
    %565 = vmatpush1.msra.mxu0 0.0
    %566 = vmatprep.subr.mxu0 0.0
    %567 = vmatpush1.msra.mxu0 0.0
    %568 = vmatprep.subr.mxu0 0.0
    %569 = vmatpush1.msra.mxu0 0.0
    %570 = vmatprep.subr.mxu0 0.0
    %571 = vmatpush1.msra.mxu0 0.0
    %572 = vmatprep.subr.mxu0 0.0
    %573 = vmatpush1.msra.mxu0 0.0
    %574 = vmatprep.subr.mxu0 0.0
    %575 = vmatpush1.msra.mxu0 0.0
    %576 = vmatprep.subr.mxu0 0.0
    %577 = vmatpush1.msra.mxu0 0.0
    %578 = vmatprep.subr.mxu0 0.0
    %579 = vmatpush1.msra.mxu0 0.0
    %580 = vmatprep.subr.mxu0 0.0
    %581 = vmatpush1.msra.mxu0 0.0
    %582 = vmatprep.subr.mxu0 0.0
    %583 = vmatpush1.msra.mxu0 0.0
    %584 = vmatprep.subr.mxu0 0.0
    %585 = vmatpush1.msra.mxu0 0.0
    %586 = vmatprep.subr.mxu0 0.0
    %587 = vmatpush1.msra.mxu0 0.0
    %588 = vmatprep.subr.mxu0 0.0
    %589 = vmatpush1.msra.mxu0 0.0
    %590 = vmatprep.subr.mxu0 0.0
    %591 = vmatpush1.msra.mxu0 0.0
    %592 = vmatprep.subr.mxu0 0.0
    %593 = vmatpush1.msra.mxu0 0.0
    %594 = vmatprep.subr.mxu0 0.0
    %595 = vmatpush1.msra.mxu0 0.0
    %596 = vmatprep.subr.mxu0 0.0
    %597 = vmatpush1.msra.mxu0 0.0
    %598 = vmatprep.subr.mxu0 0.0
    %599 = vmatpush1.msra.mxu0 0.0
    %600 = vmatprep.subr.mxu0 0.0
    %601 = vmatpush1.msra.mxu0 0.0
    %602 = vmatprep.subr.mxu0 0.0
    %603 = vmatpush1.msra.mxu0 0.0
    %604 = vmatprep.subr.mxu0 0.0
    %605 = vmatpush1.msra.mxu0 0.0
    %606 = vmatprep.subr.mxu0 0.0
    %607 = vmatpush1.msra.mxu0 0.0
    %608 = vmatprep.subr.mxu0 0.0
    %609 = vmatpush1.msra.mxu0 0.0
    %610 = vmatprep.subr.mxu0 0.0
    %611 = vmatpush1.msra.mxu0 0.0
    %612 = vmatprep.subr.mxu0 0.0
    %613 = vmatpush1.msra.mxu0 0.0
    %614 = vmatprep.subr.mxu0 0.0
    %615 = vmatpush1.msra.mxu0 0.0
    %616 = vmatprep.subr.mxu0 0.0
    %617 = vmatpush1.msra.mxu0 0.0
    %618 = vmatprep.subr.mxu0 0.0
    %619 = vmatpush1.msra.mxu0 0.0
    %620 = vmatprep.subr.mxu0 0.0
    %621 = vmatpush1.msra.mxu0 0.0
    %622 = vmatprep.subr.mxu0 0.0
    %623 = vmatpush1.msra.mxu0 0.0
    %624 = vmatprep.mubr.f32.mxu0 0.0
    %625 = vmatmul.mubr.f32.gmra.mrb[0].mxu0 %v555
    %v626 = vpop.f32.mrb[0].mxu0
    %v627 = vadd.f32 %v538, %v626
    %v628 = vpop.f32.mrb[0].mxu0
    %629 = vmatprep.mubr.f32.mxu0 0.0
    %630 = vmatmul.mubr.f32.gmra.mrb[0].mxu0 %v558
    %v631 = vpop.f32.mrb[0].mxu0
    %v632 = vadd.f32 %v543, %v631
    %v633 = vpop.f32.mrb[0].mxu0
    %634 = vdwg.mxu0
    %v636 = vsel %vm199, %v627, 0
    %v639 = vsel %vm199, %v632, 0
    %641 = vmatprep.subr.mxu0 0.0
    %642 = vmatpush1.msra.mxu0 %v58
    %643 = vmatprep.subr.mxu0 0.0
    %644 = vmatpush1.msra.mxu0 %v59
    %645 = vmatprep.subr.mxu0 0.0
    %646 = vmatpush1.msra.mxu0 %v60
    %647 = vmatprep.subr.mxu0 0.0
    %648 = vmatpush1.msra.mxu0 %v61
    %649 = vmatprep.subr.mxu0 0.0
    %650 = vmatpush1.msra.mxu0 0.0
    %651 = vmatprep.subr.mxu0 0.0
    %652 = vmatpush1.msra.mxu0 0.0
    %653 = vmatprep.subr.mxu0 0.0
    %654 = vmatpush1.msra.mxu0 0.0
    %655 = vmatprep.subr.mxu0 0.0
    %656 = vmatpush1.msra.mxu0 0.0
    %657 = vmatprep.subr.mxu0 0.0
    %658 = vmatpush1.msra.mxu0 0.0
    %659 = vmatprep.subr.mxu0 0.0
    %660 = vmatpush1.msra.mxu0 0.0
    %661 = vmatprep.subr.mxu0 0.0
    %662 = vmatpush1.msra.mxu0 0.0
    %663 = vmatprep.subr.mxu0 0.0
    %664 = vmatpush1.msra.mxu0 0.0
    %665 = vmatprep.subr.mxu0 0.0
    %666 = vmatpush1.msra.mxu0 0.0
    %667 = vmatprep.subr.mxu0 0.0
    %668 = vmatpush1.msra.mxu0 0.0
    %669 = vmatprep.subr.mxu0 0.0
    %670 = vmatpush1.msra.mxu0 0.0
    %671 = vmatprep.subr.mxu0 0.0
    %672 = vmatpush1.msra.mxu0 0.0
    %673 = vmatprep.subr.mxu0 0.0
    %674 = vmatpush1.msra.mxu0 0.0
    %675 = vmatprep.subr.mxu0 0.0
    %676 = vmatpush1.msra.mxu0 0.0
    %677 = vmatprep.subr.mxu0 0.0
    %678 = vmatpush1.msra.mxu0 0.0
    %679 = vmatprep.subr.mxu0 0.0
    %680 = vmatpush1.msra.mxu0 0.0
    %681 = vmatprep.subr.mxu0 0.0
    %682 = vmatpush1.msra.mxu0 0.0
    %683 = vmatprep.subr.mxu0 0.0
    %684 = vmatpush1.msra.mxu0 0.0
    %685 = vmatprep.subr.mxu0 0.0
    %686 = vmatpush1.msra.mxu0 0.0
    %687 = vmatprep.subr.mxu0 0.0
    %688 = vmatpush1.msra.mxu0 0.0
    %689 = vmatprep.subr.mxu0 0.0
    %690 = vmatpush1.msra.mxu0 0.0
    %691 = vmatprep.subr.mxu0 0.0
    %692 = vmatpush1.msra.mxu0 0.0
    %693 = vmatprep.subr.mxu0 0.0
    %694 = vmatpush1.msra.mxu0 0.0
    %695 = vmatprep.subr.mxu0 0.0
    %696 = vmatpush1.msra.mxu0 0.0
    %697 = vmatprep.subr.mxu0 0.0
    %698 = vmatpush1.msra.mxu0 0.0
    %699 = vmatprep.subr.mxu0 0.0
    %700 = vmatpush1.msra.mxu0 0.0
    %701 = vmatprep.subr.mxu0 0.0
    %702 = vmatpush1.msra.mxu0 0.0
    %703 = vmatprep.subr.mxu0 0.0
    %704 = vmatpush1.msra.mxu0 0.0
    %705 = vmatprep.mubr.f32.mxu0 0.0
    %706 = vmatmul.mubr.f32.gmra.mrb[0].mxu0 %v636
    %v707 = vpop.f32.mrb[0].mxu0
    %v708 = vadd.f32 0.0, %v707
    %v709 = vpop.f32.mrb[0].mxu0
    %710 = vmatprep.mubr.f32.mxu0 0.0
    %711 = vmatmul.mubr.f32.gmra.mrb[0].mxu0 %v639
    %v712 = vpop.f32.mrb[0].mxu0
    %v713 = vadd.f32 0.0, %v712
    %v714 = vpop.f32.mrb[0].mxu0
    %715 = vdwg.mxu0
    %718 = vrot.lane.b32.xlu0 %v708, 96
    %v719 = vpop.permute.xlu0 %718
    %720 = vrot.lane.b32.xlu0 %v713, 96
    %v721 = vpop.permute.xlu0 %720
    %v725 = vsel %vm400, %v66, 0
    %v728 = vsel %vm400, %v67, 0
    %730 = vmatprep.subr.mxu0 0.0
    %731 = vmatpush1.msra.mxu0 %v719
    %732 = vmatprep.subr.mxu0 0.0
    %733 = vmatpush1.msra.mxu0 %v721
    %734 = vmatprep.subr.mxu0 0.0
    %735 = vmatpush1.msra.mxu0 0.0
    %736 = vmatprep.subr.mxu0 0.0
    %737 = vmatpush1.msra.mxu0 0.0
    %738 = vmatprep.subr.mxu0 0.0
    %739 = vmatpush1.msra.mxu0 0.0
    %740 = vmatprep.subr.mxu0 0.0
    %741 = vmatpush1.msra.mxu0 0.0
    %742 = vmatprep.subr.mxu0 0.0
    %743 = vmatpush1.msra.mxu0 0.0
    %744 = vmatprep.subr.mxu0 0.0
    %745 = vmatpush1.msra.mxu0 0.0
    %746 = vmatprep.subr.mxu0 0.0
    %747 = vmatpush1.msra.mxu0 0.0
    %748 = vmatprep.subr.mxu0 0.0
    %749 = vmatpush1.msra.mxu0 0.0
    %750 = vmatprep.subr.mxu0 0.0
    %751 = vmatpush1.msra.mxu0 0.0
    %752 = vmatprep.subr.mxu0 0.0
    %753 = vmatpush1.msra.mxu0 0.0
    %754 = vmatprep.subr.mxu0 0.0
    %755 = vmatpush1.msra.mxu0 0.0
    %756 = vmatprep.subr.mxu0 0.0
    %757 = vmatpush1.msra.mxu0 0.0
    %758 = vmatprep.subr.mxu0 0.0
    %759 = vmatpush1.msra.mxu0 0.0
    %760 = vmatprep.subr.mxu0 0.0
    %761 = vmatpush1.msra.mxu0 0.0
    %762 = vmatprep.subr.mxu0 0.0
    %763 = vmatpush1.msra.mxu0 0.0
    %764 = vmatprep.subr.mxu0 0.0
    %765 = vmatpush1.msra.mxu0 0.0
    %766 = vmatprep.subr.mxu0 0.0
    %767 = vmatpush1.msra.mxu0 0.0
    %768 = vmatprep.subr.mxu0 0.0
    %769 = vmatpush1.msra.mxu0 0.0
    %770 = vmatprep.subr.mxu0 0.0
    %771 = vmatpush1.msra.mxu0 0.0
    %772 = vmatprep.subr.mxu0 0.0
    %773 = vmatpush1.msra.mxu0 0.0
    %774 = vmatprep.subr.mxu0 0.0
    %775 = vmatpush1.msra.mxu0 0.0
    %776 = vmatprep.subr.mxu0 0.0
    %777 = vmatpush1.msra.mxu0 0.0
    %778 = vmatprep.subr.mxu0 0.0
    %779 = vmatpush1.msra.mxu0 0.0
    %780 = vmatprep.subr.mxu0 0.0
    %781 = vmatpush1.msra.mxu0 0.0
    %782 = vmatprep.subr.mxu0 0.0
    %783 = vmatpush1.msra.mxu0 0.0
    %784 = vmatprep.subr.mxu0 0.0
    %785 = vmatpush1.msra.mxu0 0.0
    %786 = vmatprep.subr.mxu0 0.0
    %787 = vmatpush1.msra.mxu0 0.0
    %788 = vmatprep.subr.mxu0 0.0
    %789 = vmatpush1.msra.mxu0 0.0
    %790 = vmatprep.subr.mxu0 0.0
    %791 = vmatpush1.msra.mxu0 0.0
    %792 = vmatprep.subr.mxu0 0.0
    %793 = vmatpush1.msra.mxu0 0.0
    %794 = vmatprep.mubr.f32.mxu0 0.0
    %795 = vmatmul.mubr.f32.gmra.mrb[0].mxu0 %v725
    %v796 = vpop.f32.mrb[0].mxu0
    %v797 = vadd.f32 0.0, %v796
    %v798 = vpop.f32.mrb[0].mxu0
    %799 = vmatprep.mubr.f32.mxu0 0.0
    %800 = vmatmul.mubr.f32.gmra.mrb[0].mxu0 %v728
    %v801 = vpop.f32.mrb[0].mxu0
    %v802 = vadd.f32 0.0, %v801
    %v803 = vpop.f32.mrb[0].mxu0
    %804 = vdwg.mxu0
    %v805 = vadd.f32 %v708, %v797
    %v806 = vadd.f32 %v713, %v802
    %v807 = vmul.f32 %v805, 0.5
    %v808 = vmul.f32 %v806, 0.5
    %v809 = vmul.f32 %v805, 0.70710677
    %v810 = vmul.f32 %v806, 0.70710677
    %v811 = verf.f32.pop %v809
    %v812 = verf.f32.pop %v810
    %v813 = vadd.f32 %v811, 1.0
    %v814 = vadd.f32 %v812, 1.0
    %v815 = vmul.f32 %v807, %v813
    %v816 = vmul.f32 %v808, %v814
    %v818 = vsel %vm199, %v43, 0
    %v821 = vsel %vm199, %v815, 0
    %v824 = vsel %vm199, %v816, 0
    %826 = vmatprep.subr.mxu0 0.0
    %827 = vmatpush1.xpose.msra.mxu0 %v821
    %828 = vmatprep.subr.mxu0 0.0
    %829 = vmatpush1.xpose.msra.mxu0 %v824
    %830 = vmatprep.subr.mxu0 0.0
    %831 = vmatpush1.xpose.msra.mxu0 0.0
    %832 = vmatprep.subr.mxu0 0.0
    %833 = vmatpush1.xpose.msra.mxu0 0.0
    %834 = vmatprep.subr.mxu0 0.0
    %835 = vmatpush1.xpose.msra.mxu0 0.0
    %836 = vmatprep.subr.mxu0 0.0
    %837 = vmatpush1.xpose.msra.mxu0 0.0
    %838 = vmatprep.subr.mxu0 0.0
    %839 = vmatpush1.xpose.msra.mxu0 0.0
    %840 = vmatprep.subr.mxu0 0.0
    %841 = vmatpush1.xpose.msra.mxu0 0.0
    %842 = vmatprep.subr.mxu0 0.0
    %843 = vmatpush1.xpose.msra.mxu0 0.0
    %844 = vmatprep.subr.mxu0 0.0
    %845 = vmatpush1.xpose.msra.mxu0 0.0
    %846 = vmatprep.subr.mxu0 0.0
    %847 = vmatpush1.xpose.msra.mxu0 0.0
    %848 = vmatprep.subr.mxu0 0.0
    %849 = vmatpush1.xpose.msra.mxu0 0.0
    %850 = vmatprep.subr.mxu0 0.0
    %851 = vmatpush1.xpose.msra.mxu0 0.0
    %852 = vmatprep.subr.mxu0 0.0
    %853 = vmatpush1.xpose.msra.mxu0 0.0
    %854 = vmatprep.subr.mxu0 0.0
    %855 = vmatpush1.xpose.msra.mxu0 0.0
    %856 = vmatprep.subr.mxu0 0.0
    %857 = vmatpush1.xpose.msra.mxu0 0.0
    %858 = vmatprep.subr.mxu0 0.0
    %859 = vmatpush1.xpose.msra.mxu0 0.0
    %860 = vmatprep.subr.mxu0 0.0
    %861 = vmatpush1.xpose.msra.mxu0 0.0
    %862 = vmatprep.subr.mxu0 0.0
    %863 = vmatpush1.xpose.msra.mxu0 0.0
    %864 = vmatprep.subr.mxu0 0.0
    %865 = vmatpush1.xpose.msra.mxu0 0.0
    %866 = vmatprep.subr.mxu0 0.0
    %867 = vmatpush1.xpose.msra.mxu0 0.0
    %868 = vmatprep.subr.mxu0 0.0
    %869 = vmatpush1.xpose.msra.mxu0 0.0
    %870 = vmatprep.subr.mxu0 0.0
    %871 = vmatpush1.xpose.msra.mxu0 0.0
    %872 = vmatprep.subr.mxu0 0.0
    %873 = vmatpush1.xpose.msra.mxu0 0.0
    %874 = vmatprep.subr.mxu0 0.0
    %875 = vmatpush1.xpose.msra.mxu0 0.0
    %876 = vmatprep.subr.mxu0 0.0
    %877 = vmatpush1.xpose.msra.mxu0 0.0
    %878 = vmatprep.subr.mxu0 0.0
    %879 = vmatpush1.xpose.msra.mxu0 0.0
    %880 = vmatprep.subr.mxu0 0.0
    %881 = vmatpush1.xpose.msra.mxu0 0.0
    %882 = vmatprep.subr.mxu0 0.0
    %883 = vmatpush1.xpose.msra.mxu0 0.0
    %884 = vmatprep.subr.mxu0 0.0
    %885 = vmatpush1.xpose.msra.mxu0 0.0
    %886 = vmatprep.subr.mxu0 0.0
    %887 = vmatpush1.xpose.msra.mxu0 0.0
    %888 = vmatprep.subr.mxu0 0.0
    %889 = vmatpush1.xpose.msra.mxu0 0.0
    %890 = vmatprep.mubr.f32.mxu0 0.0
    %891 = vmatmul.mubr.f32.gmra.mrb[0].mxu0 %v818
    %v892 = vpop.f32.mrb[0].mxu0
    %v893 = vadd.f32 0.0, %v892
    %v894 = vpop.f32.mrb[0].mxu0
    %895 = vdwg.mxu0
    %v896 = vtanh.pop %v893
    %vm897 = vcmask 122880
    %898 = vst.msk [vmem:[%s2] sm:$0x1] %vm897, %v896
    // Predicated region
    $region18: #{predictor_lg.1} parent=1 // pred_check
      _
    $region19: #{predictor_lg.1} parent=1 // pred_check_branch
      %900 = sbr.rel (0) target = $region21
    $region20: #{predictor_lg.1} parent=1 // pred_region
      _
    $region21: #{predictor_lg.1} parent=1 // pred_fallthru
      _
    // Predicated region
    $region22: #{predictor_lg.1} parent=1 // pred_check
      _
    $region23: #{predictor_lg.1} parent=1 // pred_check_branch
      %902 = sbr.rel (0) target = $region25
    $region24: #{predictor_lg.1} parent=1 // pred_region
      _
    $region25: #{predictor_lg.1} parent=1 // pred_fallthru
      _
    %903 = vsyncpa [#allocation3], 1
    %904 = vsyncpa [#allocation5], 1

</llo_original>
